<compile_context>
chip_gen: v7x
topology: tpu7x:2x2x1
jax: 0.10.0
libtpu: 0.0.40
codegen_flags: <defaults>
</compile_context>

<pallas_src>
import jax
import jax.numpy as jnp
from jax.experimental import pallas as pl
from jax.experimental.pallas import tpu as pltpu


_VMEM_BUDGET = 40 * 1024 * 1024  # conservative: fits v5e/v6e/v7x scoped VMEM


def _ensemble_linear_kernel(x_ref, w_ref, b_ref, o_ref, acc_ref):
    # x:(e_t,tm,tk)  w:(e_t,tk,tn)  b:(e_t,1,tn)  o:(e_t,tm,tn)  acc:(e_t,tm,tn) f32
    k = pl.program_id(3)

    @pl.when(k == 0)
    def _init():
        acc_ref[...] = jnp.zeros_like(acc_ref)

    # Batched matmul over the packed ensemble members -> MXU, f32 accumulate.
    acc_ref[...] += jnp.einsum(
        "ebi,eio->ebo",
        x_ref[...],
        w_ref[...],
        preferred_element_type=jnp.float32,
    )

    @pl.when(k == pl.num_programs(3) - 1)
    def _finalize():
        out = acc_ref[...] + b_ref[...].astype(jnp.float32)  # (e_t,tm,tn)+(e_t,1,tn)
        o_ref[...] = out.astype(o_ref.dtype)


def _pick_tile(dim, preferred):
    for t in preferred:
        if t <= dim and dim % t == 0:
            return t
    return dim  # full extent (always a legal block: equals the full array dim)


def _vmem_bytes(e_t, tm, tn, tk, in_bytes, out_bytes):
    # Double-buffered inputs/outputs + one f32 accumulator scratch.
    return (
        2 * e_t * tm * tk * in_bytes      # x
        + 2 * e_t * tk * tn * in_bytes    # w
        + 2 * e_t * tn * 4                # bias (kept f32)
        + 2 * e_t * tm * tn * out_bytes   # out
        + e_t * tm * tn * 4               # acc scratch
    )


def _choose_tiles(E, B, I, O, in_bytes, out_bytes):
    tm = _pick_tile(B, (512, 256, 128))
    tn = _pick_tile(O, (512, 256, 128))
    tk = _pick_tile(I, (1024, 512, 256, 128))
    # Shrink the K tile first if a single ensemble member is already too big.
    while (_vmem_bytes(1, tm, tn, tk, in_bytes, out_bytes) > _VMEM_BUDGET
           and tk > 128 and tk % 2 == 0 and I % (tk // 2) == 0):
        tk //= 2
    # Pack as many ensemble members per grid step as fit the budget
    # (amortizes the ~0.35 us per-grid-step overhead; e_t == E for small cases).
    e_t = 1
    for cand in range(E, 0, -1):
        if E % cand == 0 and _vmem_bytes(cand, tm, tn, tk, in_bytes, out_bytes) <= _VMEM_BUDGET:
            e_t = cand
            break
    return e_t, tm, tn, tk


def ensemble_linear(x, weight, bias, *, mxu_dtype=None):
    """x: (E, B, I), weight: (E, I, O), bias: (E, O) -> (E, B, O).

    mxu_dtype: optionally cast matmul operands (e.g. jnp.bfloat16 on v6e/v7x).
    Accumulation, bias add and the output stay at the original precision.
    """
    E, B, I = x.shape
    assert weight.shape[:2] == (E, I)
    O = weight.shape[2]
    assert bias.shape == (E, O)
    out_dtype = x.dtype

    # Lane-dense output: pad O up to 128 so stores are full-width (unmasked).
    O_pad = 128 if O < 128 else O
    if O_pad != O:
        weight = jnp.pad(weight, ((0, 0), (0, 0), (0, O_pad - O)))
        bias = jnp.pad(bias, ((0, 0), (0, O_pad - O)))

    # Optional bf16 MXU operands (v6e/v7x fast path); bias stays f32.
    if mxu_dtype is not None:
        x = x.astype(mxu_dtype)
        weight = weight.astype(mxu_dtype)
    bias3 = bias.astype(jnp.float32).reshape(E, 1, O_pad)

    in_bytes = jnp.dtype(x.dtype).itemsize
    out_bytes = jnp.dtype(out_dtype).itemsize
    e_t, tm, tn, tk = _choose_tiles(E, B, I, O_pad, in_bytes, out_bytes)

    grid = (E // e_t, B // tm, O_pad // tn, I // tk)

    est_vmem = _vmem_bytes(e_t, tm, tn, tk, in_bytes, out_bytes)
    vmem_limit = int(min(max(2 * est_vmem, 32 * 1024 * 1024), 48 * 1024 * 1024))

    cost = pl.CostEstimate(
        flops=2 * E * B * I * O_pad,
        transcendentals=0,
        bytes_accessed=(x.size * in_bytes + weight.size * in_bytes
                        + bias3.size * 4 + E * B * O_pad * out_bytes),
    )

    out = pl.pallas_call(
        _ensemble_linear_kernel,
        out_shape=jax.ShapeDtypeStruct((E, B, O_pad), out_dtype),
        grid_spec=pltpu.PrefetchScalarGridSpec(
            num_scalar_prefetch=0,
            grid=grid,
            in_specs=[
                pl.BlockSpec((e_t, tm, tk), lambda e, i, j, k: (e, i, k)),
                pl.BlockSpec((e_t, tk, tn), lambda e, i, j, k: (e, k, j)),
                pl.BlockSpec((e_t, 1, tn), lambda e, i, j, k: (e, 0, j)),
            ],
            out_specs=pl.BlockSpec((e_t, tm, tn), lambda e, i, j, k: (e, i, j)),
            scratch_shapes=[pltpu.VMEM((e_t, tm, tn), jnp.float32)],
        ),
        compiler_params=pltpu.CompilerParams(
            # K (reduction) axis last + arbitrary; others parallel so v7x can
            # shard them across its two TensorCores when the grid is > 1.
            dimension_semantics=("parallel", "parallel", "parallel", "arbitrary"),
            vmem_limit_bytes=vmem_limit,
        ),
        cost_estimate=cost,
    )(x, weight, bias3)

    if O_pad != O:
        out = out[:, :, :O]
    return out


if __name__ == "__main__":
    # Small shapes consistent with the module's forward.
    ensemble_size = 4
    batch = 8
    in_features = 32
    out_features = 16

    key = jax.random.PRNGKey(0)
    k_x, k_w, k_b = jax.random.split(key, 3)

    x = jax.random.normal(k_x, (ensemble_size, batch, in_features), dtype=jnp.float32)
    weight = jax.random.normal(
        k_w, (ensemble_size, in_features, out_features), dtype=jnp.float32
    ) * (1.0 / jnp.sqrt(in_features))
    bias = 0.1 * jax.random.normal(
        k_b, (ensemble_size, out_features), dtype=jnp.float32)

    ref = jnp.einsum("ebi,eio->ebo", x, weight) + bias[:, None, :]

    # f32 path: single grid step, lane-dense (padded-to-128) output.
    out = jax.block_until_ready(ensemble_linear(x, weight, bias))
    assert out.shape == ref.shape
    assert jnp.allclose(out, ref, atol=1e-5, rtol=1e-5)

    # bf16-MXU path (v6e/v7x fast path): f32 accumulate, looser tolerance.
    out_bf16 = jax.block_until_ready(
        ensemble_linear(x, weight, bias, mxu_dtype=jnp.bfloat16))
    assert out_bf16.shape == ref.shape
    assert jnp.allclose(out_bf16, ref, atol=5e-2, rtol=5e-2)

    # Slightly larger case exercising K-axis accumulation (I=2048 -> two K
    # tiles) and a naturally lane-dense O=128 output (no padding path).
    E2, B2, I2, O2 = 3, 16, 2048, 128
    k2x, k2w, k2b = jax.random.split(jax.random.PRNGKey(1), 3)
    x2 = jax.random.normal(k2x, (E2, B2, I2), dtype=jnp.float32)
    w2 = jax.random.normal(k2w, (E2, I2, O2), dtype=jnp.float32) * (1.0 / jnp.sqrt(I2))
    b2 = 0.1 * jax.random.normal(k2b, (E2, O2), dtype=jnp.float32)
    out2 = jax.block_until_ready(ensemble_linear(x2, w2, b2))
    ref2 = jnp.einsum("ebi,eio->ebo", x2, w2) + b2[:, None, :]
    assert jnp.allclose(out2, ref2, atol=1e-3, rtol=1e-3)

    print("KERNEL_OK")
</pallas_src>

<mosaic_0001>
module attributes {stable_mosaic.version = 11 : i64} {
  func.func @_ensemble_linear_kernel(%arg0: i32, %arg1: i32, %arg2: i32, %arg3: i32, %arg4: memref<4x8x32xf32, #tpu.memory_space<vmem>>, %arg5: memref<4x32x128xf32, #tpu.memory_space<vmem>>, %arg6: memref<4x1x128xf32, #tpu.memory_space<vmem>>, %arg7: memref<4x8x128xf32, #tpu.memory_space<vmem>>, %arg8: memref<4x8x128xf32, #tpu.memory_space<vmem>>) attributes {dimension_semantics = [#tpu.dimension_semantics<parallel>, #tpu.dimension_semantics<parallel>, #tpu.dimension_semantics<parallel>, #tpu.dimension_semantics<arbitrary>], iteration_bounds = array<i64: 1, 1, 1, 1>, scalar_prefetch = 0 : i64, scratch_operands = 1 : i64, tpu.core_type = #tpu.core_type<tc>, window_params = [{transform_indices = @transform_0, window_bounds = array<i64: 4, 8, 32>}, {transform_indices = @transform_1, window_bounds = array<i64: 4, 32, 128>}, {transform_indices = @transform_2, window_bounds = array<i64: 4, 1, 128>}, {transform_indices = @transform_3, window_bounds = array<i64: 4, 8, 128>}]} {
    %c0_i32 = arith.constant 0 : i32
    %0 = arith.cmpi eq, %arg3, %c0_i32 : i32
    %1 = arith.extui %0 : i1 to i32
    %c0_i32_0 = arith.constant 0 : i32
    %2 = arith.cmpi ne, %1, %c0_i32_0 : i32
    scf.if %2 {
      %cst_14 = arith.constant 0.000000e+00 : f32
      %12 = vector.broadcast %cst_14 : f32 to vector<4x8x128xf32>
      %c0_15 = arith.constant 0 : index
      %c0_16 = arith.constant 0 : index
      %c0_17 = arith.constant 0 : index
      %13 = vector.load %arg8[%c0_15, %c0_16, %c0_17] : memref<4x8x128xf32, #tpu.memory_space<vmem>>, vector<4x8x128xf32>
      tpu.vector_store %arg8[%c0_15, %c0_16, %c0_17], %12 {strides = array<i32>} : memref<4x8x128xf32, #tpu.memory_space<vmem>>, vector<4x8x128xf32>,
    } else {
    }
    %c0 = arith.constant 0 : index
    %c0_1 = arith.constant 0 : index
    %c0_2 = arith.constant 0 : index
    %3 = vector.load %arg8[%c0, %c0_1, %c0_2] : memref<4x8x128xf32, #tpu.memory_space<vmem>>, vector<4x8x128xf32>
    %c0_3 = arith.constant 0 : index
    %c0_4 = arith.constant 0 : index
    %c0_5 = arith.constant 0 : index
    %4 = vector.load %arg4[%c0_3, %c0_4, %c0_5] : memref<4x8x32xf32, #tpu.memory_space<vmem>>, vector<4x8x32xf32>
    %c0_6 = arith.constant 0 : index
    %c0_7 = arith.constant 0 : index
    %c0_8 = arith.constant 0 : index
    %5 = vector.load %arg5[%c0_6, %c0_7, %c0_8] : memref<4x32x128xf32, #tpu.memory_space<vmem>>, vector<4x32x128xf32>
    "tpu.trace_start"() <{level = 10 : i32, message = "ebi,eio->ebo"}> : () -> ()
    %cst = arith.constant dense<0.000000e+00> : vector<4x8x128xf32>
    %6 = tpu.matmul %4, %5, %cst {dimension_numbers = #tpu.dot_dimension_numbers<[2], [1], [1], [2], [0, 0, 0, 1, 1, 2], [0], [0]>} : vector<4x8x32xf32>, vector<4x32x128xf32>, vector<4x8x128xf32> -> vector<4x8x128xf32>
    "tpu.trace_stop"() : () -> ()
    %7 = arith.addf %3, %6 : vector<4x8x128xf32>
    %c0_9 = arith.constant 0 : index
    %c0_10 = arith.constant 0 : index
    %c0_11 = arith.constant 0 : index
    %8 = vector.load %arg8[%c0_9, %c0_10, %c0_11] : memref<4x8x128xf32, #tpu.memory_space<vmem>>, vector<4x8x128xf32>
    tpu.vector_store %arg8[%c0_9, %c0_10, %c0_11], %7 {strides = array<i32>} : memref<4x8x128xf32, #tpu.memory_space<vmem>>, vector<4x8x128xf32>,
    %c0_i32_12 = arith.constant 0 : i32
    %9 = arith.cmpi eq, %arg3, %c0_i32_12 : i32
    %10 = arith.extui %9 : i1 to i32
    %c0_i32_13 = arith.constant 0 : i32
    %11 = arith.cmpi ne, %10, %c0_i32_13 : i32
    scf.if %11 {
      %c0_14 = arith.constant 0 : index
      %c0_15 = arith.constant 0 : index
      %c0_16 = arith.constant 0 : index
      %12 = vector.load %arg8[%c0_14, %c0_15, %c0_16] : memref<4x8x128xf32, #tpu.memory_space<vmem>>, vector<4x8x128xf32>
      %c0_17 = arith.constant 0 : index
      %c0_18 = arith.constant 0 : index
      %c0_19 = arith.constant 0 : index
      %13 = vector.load %arg6[%c0_17, %c0_18, %c0_19] : memref<4x1x128xf32, #tpu.memory_space<vmem>>, vector<4x1x128xf32>
      %14 = vector.broadcast %13 : vector<4x1x128xf32> to vector<4x8x128xf32>
      %15 = arith.addf %12, %14 : vector<4x8x128xf32>
      %c0_20 = arith.constant 0 : index
      %c0_21 = arith.constant 0 : index
      %c0_22 = arith.constant 0 : index
      %16 = vector.load %arg7[%c0_20, %c0_21, %c0_22] : memref<4x8x128xf32, #tpu.memory_space<vmem>>, vector<4x8x128xf32>
      tpu.vector_store %arg7[%c0_20, %c0_21, %c0_22], %15 {strides = array<i32>} : memref<4x8x128xf32, #tpu.memory_space<vmem>>, vector<4x8x128xf32>,
    } else {
    }
    return
  }
  func.func @transform_0(%arg0: i32, %arg1: i32, %arg2: i32, %arg3: i32) -> (i32, i32, i32) {
    %c0_i32 = arith.constant 0 : i32
    return %arg0, %arg1, %arg3 : i32, i32, i32
  }
  func.func @transform_1(%arg0: i32, %arg1: i32, %arg2: i32, %arg3: i32) -> (i32, i32, i32) {
    %c0_i32 = arith.constant 0 : i32
    return %arg0, %arg3, %arg2 : i32, i32, i32
  }
  func.func @transform_2(%arg0: i32, %arg1: i32, %arg2: i32, %arg3: i32) -> (i32, i32, i32) {
    %c0_i32 = arith.constant 0 : i32
    %c0_i32_0 = arith.constant 0 : i32
    return %arg0, %c0_i32, %arg2 : i32, i32, i32
  }
  func.func @transform_3(%arg0: i32, %arg1: i32, %arg2: i32, %arg3: i32) -> (i32, i32, i32) {
    %c0_i32 = arith.constant 0 : i32
    return %arg0, %arg1, %arg2 : i32, i32, i32
  }
}

</mosaic_0001>

<llo_original>
// kernel: tpu_custom_call.1
$region0: #{tpu_custom_call.1}
  #allocation0 [shape = 'u32[]', space=smem, size = 0x4, offset = 0x4, fixed_abs, tag = 'smem constant byte address 0x4 - core index']
  #allocation1 [shape = 'u32[144,128]{1,0:T(1,128)}', space=vmem, size = 0x12000, scoped, tag = 'internal scratch']
  #allocation2 [shape = 'f32[4,8,128]{2,1,0:T(8,128)}', space=vmem, size = 0x4000, scoped, tag = 'scratch operand']
  %s0 = inlined_call_operand.hbm [shape: f32[4,8,32], index: 0, kind: input, shape index: {}]
  %s1 = inlined_call_operand.hbm [shape: f32[4,32,128], index: 1, kind: input, shape index: {}]
  %s2 = inlined_call_operand.vmem [shape: f32[4,1,128], index: 2, kind: input, shape index: {}]
  %s3 = inlined_call_operand.hbm [shape: f32[4,8,128], index: 3, kind: output, shape index: {}]
  %s4 = sld [smem:[#allocation0]]
  $region38: #{tpu_custom_call.1} parent=0
    _
  %s6 = ssub.s32 1, %s4
  %s7 = scalar_select 0, %s6, %s4
  $region1: #{tpu_custom_call.1} parent=0
    #allocation3 [shape = 'u8[16384]{0}', space=vmem, size = 0x4000, scoped, tag = 'input window, operand 0, single buffered']
    #allocation4 [shape = 's32[1]{0}', space=sflag, size = 0x4, scoped, tag = 'scoped memory for tpu_custom_call.1']
    #allocation5 [shape = 's32[1]{0}', space=sflag, size = 0x4, scoped, tag = 'scoped memory for tpu_custom_call.1']
    #allocation6 [shape = 'u8[65536]{0}', space=vmem, size = 0x10000, scoped, tag = 'input window, operand 1, single buffered']
    #allocation7 [shape = 's32[1]{0}', space=sflag, size = 0x4, scoped, tag = 'scoped memory for tpu_custom_call.1']
    #allocation8 [shape = 'u8[16384]{0}', space=vmem, size = 0x4000, scoped, tag = 'output window, operand 0, single buffered']
    %8 = vsyncpa [#allocation4], 0
    %9 = vsyncpa [#allocation7], 0
    %10 = vsyncpa [#allocation5], 0
    // Predicated region
    $region2: #{tpu_custom_call.1} parent=1 // pred_check
      _
    $region3: #{tpu_custom_call.1} parent=1 // pred_check_branch
      %12 = sbr.rel (0) target = $region5
    $region4: #{tpu_custom_call.1} parent=1 // pred_region
      %s14 = ssub.s32 512, 512
      %15 = vsyncadd [#allocation4], %s14
      %s16 = sshll.u32 [#allocation3], 4
      %s17 = int_to_ptr.vmem [resolvable:$true] %s16
      %22 = dma.hbm_to_vmem [thread:$0]  %s0, 512, %s17, [#allocation4], 128, 128, 8
    $region5: #{tpu_custom_call.1} parent=1 // pred_fallthru
      _
    // Predicated region
    $region6: #{tpu_custom_call.1} parent=1 // pred_check
      _
    $region7: #{tpu_custom_call.1} parent=1 // pred_check_branch
      %24 = sbr.rel (0) target = $region9
    $region8: #{tpu_custom_call.1} parent=1 // pred_region
      %s26 = ssub.s32 2048, 2048
      %27 = vsyncadd [#allocation7], %s26
      %s28 = sshll.u32 [#allocation6], 4
      %s29 = int_to_ptr.vmem [resolvable:$true] %s28
      %34 = dma.hbm_to_vmem [thread:$0]  %s1, 2048, %s29, [#allocation7], 128, 128, 8
    $region9: #{tpu_custom_call.1} parent=1 // pred_fallthru
      _
    // Predicated region
    $region10: #{tpu_custom_call.1} parent=1 // pred_check
      _
    $region11: #{tpu_custom_call.1} parent=1 // pred_check_branch
      %36 = sbr.rel (0) target = $region13
    $region12: #{tpu_custom_call.1} parent=1 // pred_region
      _
    $region13: #{tpu_custom_call.1} parent=1 // pred_fallthru
      _
    // Predicated region
    $region14: #{tpu_custom_call.1} parent=1 // pred_check
      _
    $region15: #{tpu_custom_call.1} parent=1 // pred_check_branch
      %38 = sbr.rel (0) target = $region17
    $region16: #{tpu_custom_call.1} parent=1 // pred_region
      %39 = dma.done [#allocation4], 512
    $region17: #{tpu_custom_call.1} parent=1 // pred_fallthru
      _
    // Predicated region
    $region18: #{tpu_custom_call.1} parent=1 // pred_check
      _
    $region19: #{tpu_custom_call.1} parent=1 // pred_check_branch
      %41 = sbr.rel (0) target = $region21
    $region20: #{tpu_custom_call.1} parent=1 // pred_region
      %42 = dma.done [#allocation7], 2048
    $region21: #{tpu_custom_call.1} parent=1 // pred_fallthru
      _
    %p43 = scmp.eq.s32.totalorder 0, 0
    // Predicated region
    $region22: #{tpu_custom_call.1} parent=1 // pred_check
      %p44 = pneg %p43
    $region23: #{tpu_custom_call.1} parent=1 // pred_check_branch
      %46 = sbr.rel (%p44) target = $region25
    $region24: #{tpu_custom_call.1} parent=1 // pred_region
      %47 = vst [vmem:[#allocation2] sm:$0xff] 0.0
      %48 = vst [vmem:[#allocation2 + $0x8] sm:$0xff] 0.0
      %49 = vst [vmem:[#allocation2 + $0x10] sm:$0xff] 0.0
      %50 = vst [vmem:[#allocation2 + $0x18] sm:$0xff] 0.0
    $region25: #{tpu_custom_call.1} parent=1 // pred_fallthru
      _
    %v51 = vld [vmem:[#allocation2] sm:$0xff]
    %v52 = vld [vmem:[#allocation2 + $0x8] sm:$0xff]
    %v53 = vld [vmem:[#allocation2 + $0x10] sm:$0xff]
    %v54 = vld [vmem:[#allocation2 + $0x18] sm:$0xff]
    %v55 = vld [vmem:[#allocation3] sm:$0xff]
    %v56 = vld [vmem:[#allocation3 + $0x8] sm:$0xff]
    %v57 = vld [vmem:[#allocation3 + $0x10] sm:$0xff]
    %v58 = vld [vmem:[#allocation3 + $0x18] sm:$0xff]
    %v59 = vld [vmem:[#allocation6] sm:$0xff]
    %v60 = vld [vmem:[#allocation6 + $0x8] sm:$0xff]
    %v61 = vld [vmem:[#allocation6 + $0x10] sm:$0xff]
    %v62 = vld [vmem:[#allocation6 + $0x18] sm:$0xff]
    %v63 = vld [vmem:[#allocation6 + $0x20] sm:$0xff]
    %v64 = vld [vmem:[#allocation6 + $0x28] sm:$0xff]
    %v65 = vld [vmem:[#allocation6 + $0x30] sm:$0xff]
    %v66 = vld [vmem:[#allocation6 + $0x38] sm:$0xff]
    %v67 = vld [vmem:[#allocation6 + $0x40] sm:$0xff]
    %v68 = vld [vmem:[#allocation6 + $0x48] sm:$0xff]
    %v69 = vld [vmem:[#allocation6 + $0x50] sm:$0xff]
    %v70 = vld [vmem:[#allocation6 + $0x58] sm:$0xff]
    %v71 = vld [vmem:[#allocation6 + $0x60] sm:$0xff]
    %v72 = vld [vmem:[#allocation6 + $0x68] sm:$0xff]
    %v73 = vld [vmem:[#allocation6 + $0x70] sm:$0xff]
    %v74 = vld [vmem:[#allocation6 + $0x78] sm:$0xff]
    %vm75 = vcmask 261120
    %v77 = vsel %vm75, %v55, 0
    %79 = vmatprep.subr.mxu0 0.0
    %80 = vmatpush1.msra.mxu0 %v59
    %81 = vmatprep.subr.mxu0 0.0
    %82 = vmatpush1.msra.mxu0 %v60
    %83 = vmatprep.subr.mxu0 0.0
    %84 = vmatpush1.msra.mxu0 %v61
    %85 = vmatprep.subr.mxu0 0.0
    %86 = vmatpush1.msra.mxu0 %v62
    %87 = vmatprep.subr.mxu0 0.0
    %88 = vmatpush1.msra.mxu0 0.0
    %89 = vmatprep.subr.mxu0 0.0
    %90 = vmatpush1.msra.mxu0 0.0
    %91 = vmatprep.subr.mxu0 0.0
    %92 = vmatpush1.msra.mxu0 0.0
    %93 = vmatprep.subr.mxu0 0.0
    %94 = vmatpush1.msra.mxu0 0.0
    %95 = vmatprep.subr.mxu0 0.0
    %96 = vmatpush1.msra.mxu0 0.0
    %97 = vmatprep.subr.mxu0 0.0
    %98 = vmatpush1.msra.mxu0 0.0
    %99 = vmatprep.subr.mxu0 0.0
    %100 = vmatpush1.msra.mxu0 0.0
    %101 = vmatprep.subr.mxu0 0.0
    %102 = vmatpush1.msra.mxu0 0.0
    %103 = vmatprep.subr.mxu0 0.0
    %104 = vmatpush1.msra.mxu0 0.0
    %105 = vmatprep.subr.mxu0 0.0
    %106 = vmatpush1.msra.mxu0 0.0
    %107 = vmatprep.subr.mxu0 0.0
    %108 = vmatpush1.msra.mxu0 0.0
    %109 = vmatprep.subr.mxu0 0.0
    %110 = vmatpush1.msra.mxu0 0.0
    %111 = vmatprep.subr.mxu0 0.0
    %112 = vmatpush1.msra.mxu0 0.0
    %113 = vmatprep.subr.mxu0 0.0
    %114 = vmatpush1.msra.mxu0 0.0
    %115 = vmatprep.subr.mxu0 0.0
    %116 = vmatpush1.msra.mxu0 0.0
    %117 = vmatprep.subr.mxu0 0.0
    %118 = vmatpush1.msra.mxu0 0.0
    %119 = vmatprep.subr.mxu0 0.0
    %120 = vmatpush1.msra.mxu0 0.0
    %121 = vmatprep.subr.mxu0 0.0
    %122 = vmatpush1.msra.mxu0 0.0
    %123 = vmatprep.subr.mxu0 0.0
    %124 = vmatpush1.msra.mxu0 0.0
    %125 = vmatprep.subr.mxu0 0.0
    %126 = vmatpush1.msra.mxu0 0.0
    %127 = vmatprep.subr.mxu0 0.0
    %128 = vmatpush1.msra.mxu0 0.0
    %129 = vmatprep.subr.mxu0 0.0
    %130 = vmatpush1.msra.mxu0 0.0
    %131 = vmatprep.subr.mxu0 0.0
    %132 = vmatpush1.msra.mxu0 0.0
    %133 = vmatprep.subr.mxu0 0.0
    %134 = vmatpush1.msra.mxu0 0.0
    %135 = vmatprep.subr.mxu0 0.0
    %136 = vmatpush1.msra.mxu0 0.0
    %137 = vmatprep.subr.mxu0 0.0
    %138 = vmatpush1.msra.mxu0 0.0
    %139 = vmatprep.subr.mxu0 0.0
    %140 = vmatpush1.msra.mxu0 0.0
    %141 = vmatprep.subr.mxu0 0.0
    %142 = vmatpush1.msra.mxu0 0.0
    %143 = vmatprep.mubr.f32.mxu0 0.0
    %144 = vmatmul.mubr.f32.gmra.mrb[0].mxu0 %v77
    %v145 = vpop.f32.mrb[0].mxu0
    %v146 = vadd.f32 0.0, %v145
    %v147 = vpop.f32.mrb[0].mxu0
    %148 = vdwg.mxu0
    %v150 = vsel %vm75, %v56, 0
    %152 = vmatprep.subr.mxu0 0.0
    %153 = vmatpush1.msra.mxu0 %v63
    %154 = vmatprep.subr.mxu0 0.0
    %155 = vmatpush1.msra.mxu0 %v64
    %156 = vmatprep.subr.mxu0 0.0
    %157 = vmatpush1.msra.mxu0 %v65
    %158 = vmatprep.subr.mxu0 0.0
    %159 = vmatpush1.msra.mxu0 %v66
    %160 = vmatprep.subr.mxu0 0.0
    %161 = vmatpush1.msra.mxu0 0.0
    %162 = vmatprep.subr.mxu0 0.0
    %163 = vmatpush1.msra.mxu0 0.0
    %164 = vmatprep.subr.mxu0 0.0
    %165 = vmatpush1.msra.mxu0 0.0
    %166 = vmatprep.subr.mxu0 0.0
    %167 = vmatpush1.msra.mxu0 0.0
    %168 = vmatprep.subr.mxu0 0.0
    %169 = vmatpush1.msra.mxu0 0.0
    %170 = vmatprep.subr.mxu0 0.0
    %171 = vmatpush1.msra.mxu0 0.0
    %172 = vmatprep.subr.mxu0 0.0
    %173 = vmatpush1.msra.mxu0 0.0
    %174 = vmatprep.subr.mxu0 0.0
    %175 = vmatpush1.msra.mxu0 0.0
    %176 = vmatprep.subr.mxu0 0.0
    %177 = vmatpush1.msra.mxu0 0.0
    %178 = vmatprep.subr.mxu0 0.0
    %179 = vmatpush1.msra.mxu0 0.0
    %180 = vmatprep.subr.mxu0 0.0
    %181 = vmatpush1.msra.mxu0 0.0
    %182 = vmatprep.subr.mxu0 0.0
    %183 = vmatpush1.msra.mxu0 0.0
    %184 = vmatprep.subr.mxu0 0.0
    %185 = vmatpush1.msra.mxu0 0.0
    %186 = vmatprep.subr.mxu0 0.0
    %187 = vmatpush1.msra.mxu0 0.0
    %188 = vmatprep.subr.mxu0 0.0
    %189 = vmatpush1.msra.mxu0 0.0
    %190 = vmatprep.subr.mxu0 0.0
    %191 = vmatpush1.msra.mxu0 0.0
    %192 = vmatprep.subr.mxu0 0.0
    %193 = vmatpush1.msra.mxu0 0.0
    %194 = vmatprep.subr.mxu0 0.0
    %195 = vmatpush1.msra.mxu0 0.0
    %196 = vmatprep.subr.mxu0 0.0
    %197 = vmatpush1.msra.mxu0 0.0
    %198 = vmatprep.subr.mxu0 0.0
    %199 = vmatpush1.msra.mxu0 0.0
    %200 = vmatprep.subr.mxu0 0.0
    %201 = vmatpush1.msra.mxu0 0.0
    %202 = vmatprep.subr.mxu0 0.0
    %203 = vmatpush1.msra.mxu0 0.0
    %204 = vmatprep.subr.mxu0 0.0
    %205 = vmatpush1.msra.mxu0 0.0
    %206 = vmatprep.subr.mxu0 0.0
    %207 = vmatpush1.msra.mxu0 0.0
    %208 = vmatprep.subr.mxu0 0.0
    %209 = vmatpush1.msra.mxu0 0.0
    %210 = vmatprep.subr.mxu0 0.0
    %211 = vmatpush1.msra.mxu0 0.0
    %212 = vmatprep.subr.mxu0 0.0
    %213 = vmatpush1.msra.mxu0 0.0
    %214 = vmatprep.subr.mxu0 0.0
    %215 = vmatpush1.msra.mxu0 0.0
    %216 = vmatprep.mubr.f32.mxu0 0.0
    %217 = vmatmul.mubr.f32.gmra.mrb[0].mxu0 %v150
    %v218 = vpop.f32.mrb[0].mxu0
    %v219 = vadd.f32 0.0, %v218
    %v220 = vpop.f32.mrb[0].mxu0
    %221 = vdwg.mxu0
    %v223 = vsel %vm75, %v57, 0
    %225 = vmatprep.subr.mxu0 0.0
    %226 = vmatpush1.msra.mxu0 %v67
    %227 = vmatprep.subr.mxu0 0.0
    %228 = vmatpush1.msra.mxu0 %v68
    %229 = vmatprep.subr.mxu0 0.0
    %230 = vmatpush1.msra.mxu0 %v69
    %231 = vmatprep.subr.mxu0 0.0
    %232 = vmatpush1.msra.mxu0 %v70
    %233 = vmatprep.subr.mxu0 0.0
    %234 = vmatpush1.msra.mxu0 0.0
    %235 = vmatprep.subr.mxu0 0.0
    %236 = vmatpush1.msra.mxu0 0.0
    %237 = vmatprep.subr.mxu0 0.0
    %238 = vmatpush1.msra.mxu0 0.0
    %239 = vmatprep.subr.mxu0 0.0
    %240 = vmatpush1.msra.mxu0 0.0
    %241 = vmatprep.subr.mxu0 0.0
    %242 = vmatpush1.msra.mxu0 0.0
    %243 = vmatprep.subr.mxu0 0.0
    %244 = vmatpush1.msra.mxu0 0.0
    %245 = vmatprep.subr.mxu0 0.0
    %246 = vmatpush1.msra.mxu0 0.0
    %247 = vmatprep.subr.mxu0 0.0
    %248 = vmatpush1.msra.mxu0 0.0
    %249 = vmatprep.subr.mxu0 0.0
    %250 = vmatpush1.msra.mxu0 0.0
    %251 = vmatprep.subr.mxu0 0.0
    %252 = vmatpush1.msra.mxu0 0.0
    %253 = vmatprep.subr.mxu0 0.0
    %254 = vmatpush1.msra.mxu0 0.0
    %255 = vmatprep.subr.mxu0 0.0
    %256 = vmatpush1.msra.mxu0 0.0
    %257 = vmatprep.subr.mxu0 0.0
    %258 = vmatpush1.msra.mxu0 0.0
    %259 = vmatprep.subr.mxu0 0.0
    %260 = vmatpush1.msra.mxu0 0.0
    %261 = vmatprep.subr.mxu0 0.0
    %262 = vmatpush1.msra.mxu0 0.0
    %263 = vmatprep.subr.mxu0 0.0
    %264 = vmatpush1.msra.mxu0 0.0
    %265 = vmatprep.subr.mxu0 0.0
    %266 = vmatpush1.msra.mxu0 0.0
    %267 = vmatprep.subr.mxu0 0.0
    %268 = vmatpush1.msra.mxu0 0.0
    %269 = vmatprep.subr.mxu0 0.0
    %270 = vmatpush1.msra.mxu0 0.0
    %271 = vmatprep.subr.mxu0 0.0
    %272 = vmatpush1.msra.mxu0 0.0
    %273 = vmatprep.subr.mxu0 0.0
    %274 = vmatpush1.msra.mxu0 0.0
    %275 = vmatprep.subr.mxu0 0.0
    %276 = vmatpush1.msra.mxu0 0.0
    %277 = vmatprep.subr.mxu0 0.0
    %278 = vmatpush1.msra.mxu0 0.0
    %279 = vmatprep.subr.mxu0 0.0
    %280 = vmatpush1.msra.mxu0 0.0
    %281 = vmatprep.subr.mxu0 0.0
    %282 = vmatpush1.msra.mxu0 0.0
    %283 = vmatprep.subr.mxu0 0.0
    %284 = vmatpush1.msra.mxu0 0.0
    %285 = vmatprep.subr.mxu0 0.0
    %286 = vmatpush1.msra.mxu0 0.0
    %287 = vmatprep.subr.mxu0 0.0
    %288 = vmatpush1.msra.mxu0 0.0
    %289 = vmatprep.mubr.f32.mxu0 0.0
    %290 = vmatmul.mubr.f32.gmra.mrb[0].mxu0 %v223
    %v291 = vpop.f32.mrb[0].mxu0
    %v292 = vadd.f32 0.0, %v291
    %v293 = vpop.f32.mrb[0].mxu0
    %294 = vdwg.mxu0
    %v296 = vsel %vm75, %v58, 0
    %298 = vmatprep.subr.mxu0 0.0
    %299 = vmatpush1.msra.mxu0 %v71
    %300 = vmatprep.subr.mxu0 0.0
    %301 = vmatpush1.msra.mxu0 %v72
    %302 = vmatprep.subr.mxu0 0.0
    %303 = vmatpush1.msra.mxu0 %v73
    %304 = vmatprep.subr.mxu0 0.0
    %305 = vmatpush1.msra.mxu0 %v74
    %306 = vmatprep.subr.mxu0 0.0
    %307 = vmatpush1.msra.mxu0 0.0
    %308 = vmatprep.subr.mxu0 0.0
    %309 = vmatpush1.msra.mxu0 0.0
    %310 = vmatprep.subr.mxu0 0.0
    %311 = vmatpush1.msra.mxu0 0.0
    %312 = vmatprep.subr.mxu0 0.0
    %313 = vmatpush1.msra.mxu0 0.0
    %314 = vmatprep.subr.mxu0 0.0
    %315 = vmatpush1.msra.mxu0 0.0
    %316 = vmatprep.subr.mxu0 0.0
    %317 = vmatpush1.msra.mxu0 0.0
    %318 = vmatprep.subr.mxu0 0.0
    %319 = vmatpush1.msra.mxu0 0.0
    %320 = vmatprep.subr.mxu0 0.0
    %321 = vmatpush1.msra.mxu0 0.0
    %322 = vmatprep.subr.mxu0 0.0
    %323 = vmatpush1.msra.mxu0 0.0
    %324 = vmatprep.subr.mxu0 0.0
    %325 = vmatpush1.msra.mxu0 0.0
    %326 = vmatprep.subr.mxu0 0.0
    %327 = vmatpush1.msra.mxu0 0.0
    %328 = vmatprep.subr.mxu0 0.0
    %329 = vmatpush1.msra.mxu0 0.0
    %330 = vmatprep.subr.mxu0 0.0
    %331 = vmatpush1.msra.mxu0 0.0
    %332 = vmatprep.subr.mxu0 0.0
    %333 = vmatpush1.msra.mxu0 0.0
    %334 = vmatprep.subr.mxu0 0.0
    %335 = vmatpush1.msra.mxu0 0.0
    %336 = vmatprep.subr.mxu0 0.0
    %337 = vmatpush1.msra.mxu0 0.0
    %338 = vmatprep.subr.mxu0 0.0
    %339 = vmatpush1.msra.mxu0 0.0
    %340 = vmatprep.subr.mxu0 0.0
    %341 = vmatpush1.msra.mxu0 0.0
    %342 = vmatprep.subr.mxu0 0.0
    %343 = vmatpush1.msra.mxu0 0.0
    %344 = vmatprep.subr.mxu0 0.0
    %345 = vmatpush1.msra.mxu0 0.0
    %346 = vmatprep.subr.mxu0 0.0
    %347 = vmatpush1.msra.mxu0 0.0
    %348 = vmatprep.subr.mxu0 0.0
    %349 = vmatpush1.msra.mxu0 0.0
    %350 = vmatprep.subr.mxu0 0.0
    %351 = vmatpush1.msra.mxu0 0.0
    %352 = vmatprep.subr.mxu0 0.0
    %353 = vmatpush1.msra.mxu0 0.0
    %354 = vmatprep.subr.mxu0 0.0
    %355 = vmatpush1.msra.mxu0 0.0
    %356 = vmatprep.subr.mxu0 0.0
    %357 = vmatpush1.msra.mxu0 0.0
    %358 = vmatprep.subr.mxu0 0.0
    %359 = vmatpush1.msra.mxu0 0.0
    %360 = vmatprep.subr.mxu0 0.0
    %361 = vmatpush1.msra.mxu0 0.0
    %362 = vmatprep.mubr.f32.mxu0 0.0
    %363 = vmatmul.mubr.f32.gmra.mrb[0].mxu0 %v296
    %v364 = vpop.f32.mrb[0].mxu0
    %v365 = vadd.f32 0.0, %v364
    %v366 = vpop.f32.mrb[0].mxu0
    %367 = vdwg.mxu0
    %v368 = vadd.f32 %v51, %v146
    %v369 = vadd.f32 %v52, %v219
    %v370 = vadd.f32 %v53, %v292
    %v371 = vadd.f32 %v54, %v365
    %372 = vst [vmem:[#allocation2] sm:$0xff] %v368
    %373 = vst [vmem:[#allocation2 + $0x8] sm:$0xff] %v369
    %374 = vst [vmem:[#allocation2 + $0x10] sm:$0xff] %v370
    %375 = vst [vmem:[#allocation2 + $0x18] sm:$0xff] %v371
    // Predicated region
    $region26: #{tpu_custom_call.1} parent=1 // pred_check
      %p376 = pneg %p43
    $region27: #{tpu_custom_call.1} parent=1 // pred_check_branch
      %378 = sbr.rel (%p376) target = $region29
    $region28: #{tpu_custom_call.1} parent=1 // pred_region
      %v379 = vld [vmem:[#allocation2] sm:$0xff]
      %v380 = vld [vmem:[#allocation2 + $0x8] sm:$0xff]
      %v381 = vld [vmem:[#allocation2 + $0x10] sm:$0xff]
      %v382 = vld [vmem:[#allocation2 + $0x18] sm:$0xff]
      %v383 = vld [vmem:[%s2] sm:$0x1]
      %v384 = vld [vmem:[%s2 + $0x1] sm:$0x1]
      %v385 = vld [vmem:[%s2 + $0x2] sm:$0x1]
      %v386 = vld [vmem:[%s2 + $0x3] sm:$0x1]
      %v391 = vlaneseq
      %v392 = vshrl.u32 %v391, 7
      %v393 = vsub.s32 0, %v392
      %v394 = vrot.slane %v383, %v393
      %v395 = vlaneseq
      %v396 = vshrl.u32 %v395, 7
      %v397 = vsub.s32 0, %v396
      %v398 = vrot.slane %v384, %v397
      %v399 = vlaneseq
      %v400 = vshrl.u32 %v399, 7
      %v401 = vsub.s32 0, %v400
      %v402 = vrot.slane %v385, %v401
      %v403 = vlaneseq
      %v404 = vshrl.u32 %v403, 7
      %v405 = vsub.s32 0, %v404
      %v406 = vrot.slane %v386, %v405
      %v411 = vadd.f32 %v379, %v394
      %v412 = vadd.f32 %v380, %v398
      %v413 = vadd.f32 %v381, %v402
      %v414 = vadd.f32 %v382, %v406
      %415 = vst [vmem:[#allocation8] sm:$0xff] %v411
      %416 = vst [vmem:[#allocation8 + $0x8] sm:$0xff] %v412
      %417 = vst [vmem:[#allocation8 + $0x10] sm:$0xff] %v413
      %418 = vst [vmem:[#allocation8 + $0x18] sm:$0xff] %v414
    $region29: #{tpu_custom_call.1} parent=1 // pred_fallthru
      _
    // Predicated region
    $region30: #{tpu_custom_call.1} parent=1 // pred_check
      _
    $region31: #{tpu_custom_call.1} parent=1 // pred_check_branch
      %420 = sbr.rel (0) target = $region33
    $region32: #{tpu_custom_call.1} parent=1 // pred_region
      %s422 = ssub.s32 512, 512
      %423 = vsyncadd [#allocation5], %s422
      %s424 = sshll.u32 [#allocation8], 4
      %s425 = int_to_ptr.vmem [resolvable:$true] %s424
      %430 = dma.vmem_to_hbm [thread:$0]  %s425, 512, %s3, [#allocation5], 128, 128, 8
    $region33: #{tpu_custom_call.1} parent=1 // pred_fallthru
      _
    // Predicated region
    $region34: #{tpu_custom_call.1} parent=1 // pred_check
      _
    $region35: #{tpu_custom_call.1} parent=1 // pred_check_branch
      %432 = sbr.rel (0) target = $region37
    $region36: #{tpu_custom_call.1} parent=1 // pred_region
      %433 = dma.done [#allocation5], 512
    $region37: #{tpu_custom_call.1} parent=1 // pred_fallthru
      _
    %434 = vsyncpa [#allocation4], 1
    %435 = vsyncpa [#allocation7], 1
    %436 = vsyncpa [#allocation5], 1

</llo_original>
